<compile_context>
chip_gen: v7x
topology: tpu7x:2x2x1
jax: 0.10.0
libtpu: 0.0.40
codegen_flags: <defaults>
</compile_context>

<pallas_src>
import functools
import math

import jax
import jax.numpy as jnp
from jax import lax
from jax.experimental import pallas as pl
from jax.experimental.pallas import tpu as pltpu

_BIG = 1e30  # plain Python float -> inlined literal (NOT a captured jnp array)


def _round_up(x: int, m: int) -> int:
    return ((x + m - 1) // m) * m


def _dominant_onehot(w):
    """(N, E) f32 weights -> (N, E) f32 one-hot of first argmax (torch tiebreak)."""
    n, e = w.shape
    e_iota = lax.broadcasted_iota(jnp.int32, (n, e), 1)
    w_max = jnp.max(w, axis=1, keepdims=True)
    first = jnp.min(jnp.where(w >= w_max, e_iota, e), axis=1, keepdims=True)
    return (e_iota == first).astype(jnp.float32)


def _triplet_kernel(emb_r_ref, emb_c_ref, w_r_ref, w_c_ref,     # inputs
                    loss_ref, valid_ref,                         # outputs
                    hp_ref, hn_ref, rsq_ref, roh_ref,            # VMEM scratch
                    *, margin, batch, tm, tn):
    i = pl.program_id(0)        # anchor-row tile axis  ("parallel")
    j = pl.program_id(1)        # candidate-column axis ("arbitrary" / reduction)
    n_j = pl.num_programs(1)

    # ---- per-anchor-tile state, computed once (hoisted out of the column loop) ----
    @pl.when(j == 0)
    def _init():
        emb_r = emb_r_ref[...].astype(jnp.float32)
        rsq_ref[...] = jnp.sum(emb_r * emb_r, axis=1, keepdims=True)      # (tm, 1)
        roh_ref[...] = _dominant_onehot(w_r_ref[...].astype(jnp.float32))  # (tm, E)
        hp_ref[...] = jnp.full((tm, 1), -_BIG, jnp.float32)
        hn_ref[...] = jnp.full((tm, 1), _BIG, jnp.float32)

    # ---- per-column-tile quantities ----
    emb_c_f32 = emb_c_ref[...].astype(jnp.float32)
    d = emb_c_f32.shape[1]
    esq_c = emb_c_f32 * emb_c_f32
    # column squared norms directly in (1, tn) layout (one tiny MXU pass)
    csq_t = jnp.einsum("od,nd->on", jnp.ones((1, d), jnp.float32), esq_c,
                       preferred_element_type=jnp.float32)                 # (1, tn)

    # gram on the MXU in bf16 with f32 accumulation
    gram = jnp.einsum("md,nd->mn",
                      emb_r_ref[...].astype(jnp.bfloat16),
                      emb_c_ref[...].astype(jnp.bfloat16),
                      preferred_element_type=jnp.float32)                  # (tm, tn)
    dist_sq = jnp.maximum(rsq_ref[...] + csq_t - 2.0 * gram, 0.0)

    # same dominant expert <=> onehot_r @ onehot_c^T == 1 (exact in bf16: 0/1 values)
    oh_c = _dominant_onehot(w_c_ref[...].astype(jnp.float32))
    same_dom = jnp.einsum("me,ne->mn",
                          roh_ref[...].astype(jnp.bfloat16),
                          oh_c.astype(jnp.bfloat16),
                          preferred_element_type=jnp.float32) > 0.5

    row_g = i * tm + lax.broadcasted_iota(jnp.int32, (tm, tn), 0)
    col_g = j * tn + lax.broadcasted_iota(jnp.int32, (tm, tn), 1)
    off_diag = row_g != col_g
    in_range = col_g < batch          # exclude padded candidate rows
    pos_mask = same_dom & off_diag & in_range
    neg_mask = (~same_dom) & off_diag & in_range

    # ---- online batch-hard mining on squared distances ----
    hp_ref[...] = jnp.maximum(
        hp_ref[...],
        jnp.max(jnp.where(pos_mask, dist_sq, -_BIG), axis=1, keepdims=True))
    hn_ref[...] = jnp.minimum(
        hn_ref[...],
        jnp.min(jnp.where(neg_mask, dist_sq, _BIG), axis=1, keepdims=True))

    # ---- finalize on the last column step ----
    @pl.when(j == n_j - 1)
    def _finalize():
        hp_sq = hp_ref[...]
        hn_sq = hn_ref[...]
        has_pos = hp_sq > (-0.5 * _BIG)        # derived from sentinel, no extra reduce
        has_neg = hn_sq < (0.5 * _BIG)
        row_ok = (i * tm + lax.broadcasted_iota(jnp.int32, (tm, 1), 0)) < batch
        valid = has_pos & has_neg & row_ok
        hp_d = jnp.sqrt(jnp.maximum(hp_sq, 0.0))   # clamp so -_BIG never hits sqrt
        hn_d = jnp.sqrt(jnp.maximum(hn_sq, 0.0))
        per = jnp.maximum(hp_d - hn_d + margin, 0.0)
        loss_ref[...] = jnp.where(valid, per, 0.0)
        valid_ref[...] = valid.astype(jnp.float32)


def triplet_loss(embeddings, expert_weights, margin=0.5,
                 mining_strategy="batch_hard", tm=None, tn=None):
    """Pallas TPU implementation of TripletLoss.forward (batch_hard mining)."""
    assert mining_strategy == "batch_hard"
    B, D = embeddings.shape
    E = expert_weights.shape[1]
    if B < 3:
        return jnp.float32(0.0)

    # Tile selection: anchor tile TM resident, candidate tile TN streamed.
    # Sized for the smallest VMEM target (v7x: 64 MiB physical / 32 MiB scoped).
    if tm is None or tn is None:
        b8 = _round_up(B, 8)
        if b8 <= 128:
            tm = tn = b8
        else:
            tm = 128
            tn = min(512, _round_up(b8, 128))
    b_pad = _round_up(B, math.lcm(tm, tn))

    if b_pad != B:
        embeddings = jnp.pad(embeddings, ((0, b_pad - B), (0, 0)))
        expert_weights = jnp.pad(expert_weights, ((0, b_pad - B), (0, 0)))

    grid = (b_pad // tm, b_pad // tn)
    kernel = functools.partial(_triplet_kernel, margin=float(margin),
                               batch=B, tm=tm, tn=tn)

    per_loss, valid = pl.pallas_call(
        kernel,
        out_shape=(jax.ShapeDtypeStruct((b_pad, 1), jnp.float32),
                   jax.ShapeDtypeStruct((b_pad, 1), jnp.float32)),
        grid_spec=pltpu.PrefetchScalarGridSpec(
            num_scalar_prefetch=0,
            grid=grid,
            in_specs=[
                pl.BlockSpec((tm, D), lambda i, j: (i, 0)),   # anchor-row embeddings
                pl.BlockSpec((tn, D), lambda i, j: (j, 0)),   # candidate-col embeddings
                pl.BlockSpec((tm, E), lambda i, j: (i, 0)),   # anchor-row expert weights
                pl.BlockSpec((tn, E), lambda i, j: (j, 0)),   # candidate-col expert weights
            ],
            out_specs=[
                pl.BlockSpec((tm, 1), lambda i, j: (i, 0)),   # per-anchor loss
                pl.BlockSpec((tm, 1), lambda i, j: (i, 0)),   # per-anchor validity
            ],
            scratch_shapes=[
                pltpu.VMEM((tm, 1), jnp.float32),   # running hardest-positive dist^2
                pltpu.VMEM((tm, 1), jnp.float32),   # running hardest-negative dist^2
                pltpu.VMEM((tm, 1), jnp.float32),   # anchor-row squared norms
                pltpu.VMEM((tm, E), jnp.float32),   # anchor-row dominant-expert one-hot
            ]),
        compiler_params=pltpu.CompilerParams(
            dimension_semantics=("parallel", "arbitrary"),
            vmem_limit_bytes=64 * 1024 * 1024),
    )(embeddings, embeddings, expert_weights, expert_weights)

    # Final scalar mean over valid anchors (tiny O(B) reduction).
    count = jnp.sum(valid)
    total = jnp.sum(per_loss)
    return jnp.where(count > 0.0, total / jnp.maximum(count, 1.0), jnp.float32(0.0))


def _reference(embeddings, expert_weights, margin=0.5):
    """Pure-JAX reference mirroring the PyTorch semantics."""
    emb = embeddings.astype(jnp.float32)
    B = emb.shape[0]
    dom = jnp.argmax(expert_weights, axis=1)
    eye = jnp.eye(B, dtype=bool)
    pos = (dom[None, :] == dom[:, None]) & ~eye
    neg = ~(dom[None, :] == dom[:, None]) & ~eye
    sq = jnp.sum(emb * emb, 1)
    d2 = jnp.maximum(sq[:, None] + sq[None, :] - 2.0 * emb @ emb.T, 0.0)
    dist = jnp.sqrt(d2)
    hp = jnp.max(jnp.where(pos, dist, -jnp.inf), axis=1)
    hn = jnp.min(jnp.where(neg, dist, jnp.inf), axis=1)
    valid = jnp.any(pos, 1) & jnp.any(neg, 1)
    per = jnp.where(valid, jnp.maximum(hp - hn + margin, 0.0), 0.0)
    cnt = jnp.sum(valid.astype(jnp.float32))
    return jnp.where(cnt > 0, jnp.sum(per) / jnp.maximum(cnt, 1.0), 0.0)


if __name__ == "__main__":
    key = jax.random.PRNGKey(0)

    # Test 1: basic small shape, single tile.
    k1, k2 = jax.random.split(key)
    B, D, E = 8, 32, 4
    emb = jax.random.normal(k1, (B, D), dtype=jnp.float32)
    w = jax.random.uniform(k2, (B, E), dtype=jnp.float32)
    loss = jax.block_until_ready(triplet_loss(emb, w, margin=0.5))
    ref = _reference(emb, w, margin=0.5)
    assert jnp.isfinite(loss), "non-finite loss"
    # bf16 MXU operands (f32 accumulate) -> slightly looser tolerance than pure f32
    assert jnp.allclose(loss, ref, atol=3e-2, rtol=3e-2), (loss, ref)

    # Test 2: non-divisible batch (padding + masking) and a multi-tile grid that
    # exercises the online-mining accumulators and pl.when init/finalize paths.
    k3, k4 = jax.random.split(k1)
    B2, D2, E2 = 37, 48, 5
    emb2 = jax.random.normal(k3, (B2, D2), dtype=jnp.float32)
    w2 = jax.random.uniform(k4, (B2, E2), dtype=jnp.float32)
    loss2 = jax.block_until_ready(triplet_loss(emb2, w2, margin=0.5, tm=8, tn=16))
    ref2 = _reference(emb2, w2, margin=0.5)
    assert jnp.isfinite(loss2), "non-finite loss (test 2)"
    assert jnp.allclose(loss2, ref2, atol=3e-2, rtol=3e-2), (loss2, ref2)

    print("KERNEL_OK")
</pallas_src>

<mosaic_0001>
module attributes {stable_mosaic.version = 11 : i64} {
  func.func @_triplet_kernel(%arg0: i32, %arg1: i32, %arg2: memref<8x32xf32, #tpu.memory_space<vmem>>, %arg3: memref<8x32xf32, #tpu.memory_space<vmem>>, %arg4: memref<8x4xf32, #tpu.memory_space<vmem>>, %arg5: memref<8x4xf32, #tpu.memory_space<vmem>>, %arg6: memref<8x1xf32, #tpu.memory_space<vmem>>, %arg7: memref<8x1xf32, #tpu.memory_space<vmem>>, %arg8: memref<8x1xf32, #tpu.memory_space<vmem>>, %arg9: memref<8x1xf32, #tpu.memory_space<vmem>>, %arg10: memref<8x1xf32, #tpu.memory_space<vmem>>, %arg11: memref<8x4xf32, #tpu.memory_space<vmem>>) attributes {dimension_semantics = [#tpu.dimension_semantics<parallel>, #tpu.dimension_semantics<arbitrary>], iteration_bounds = array<i64: 1, 1>, scalar_prefetch = 0 : i64, scratch_operands = 4 : i64, tpu.core_type = #tpu.core_type<tc>, window_params = [{transform_indices = @transform_0, window_bounds = array<i64: 8, 32>}, {transform_indices = @transform_1, window_bounds = array<i64: 8, 32>}, {transform_indices = @transform_2, window_bounds = array<i64: 8, 4>}, {transform_indices = @transform_3, window_bounds = array<i64: 8, 4>}, {transform_indices = @transform_4, window_bounds = array<i64: 8, 1>}, {transform_indices = @transform_5, window_bounds = array<i64: 8, 1>}]} {
    %c0_i32 = arith.constant 0 : i32
    %0 = arith.cmpi eq, %arg1, %c0_i32 : i32
    %1 = arith.extui %0 : i1 to i32
    %c0_i32_0 = arith.constant 0 : i32
    %2 = arith.cmpi ne, %1, %c0_i32_0 : i32
    scf.if %2 {
      %c0_37 = arith.constant 0 : index
      %c0_38 = arith.constant 0 : index
      %74 = vector.load %arg2[%c0_37, %c0_38] : memref<8x32xf32, #tpu.memory_space<vmem>>, vector<8x32xf32>
      %75 = arith.mulf %74, %74 : vector<8x32xf32>
      %cst_39 = arith.constant dense<0.000000e+00> : vector<8xf32>
      %76 = vector.multi_reduction <add>, %75, %cst_39 [1] : vector<8x32xf32> to vector<8xf32>
      %77 = vector.shape_cast %76 : vector<8xf32> to vector<8x1xf32>
      %c0_40 = arith.constant 0 : index
      %c0_41 = arith.constant 0 : index
      %78 = vector.load %arg10[%c0_40, %c0_41] : memref<8x1xf32, #tpu.memory_space<vmem>>, vector<8x1xf32>
      tpu.vector_store %arg10[%c0_40, %c0_41], %77 {strides = array<i32>} : memref<8x1xf32, #tpu.memory_space<vmem>>, vector<8x1xf32>,
      %c0_42 = arith.constant 0 : index
      %c0_43 = arith.constant 0 : index
      %79 = vector.load %arg4[%c0_42, %c0_43] : memref<8x4xf32, #tpu.memory_space<vmem>>, vector<8x4xf32>
      %80 = tpu.iota {dimensions = array<i32: 1>} : vector<8x4xi32>
      %cst_44 = arith.constant dense<0xFF800000> : vector<8xf32>
      %81 = vector.multi_reduction <maximumf>, %79, %cst_44 [1] : vector<8x4xf32> to vector<8xf32>
      %82 = vector.shape_cast %81 : vector<8xf32> to vector<8x1xf32>
      %83 = vector.broadcast %82 : vector<8x1xf32> to vector<8x4xf32>
      %84 = arith.cmpf oge, %79, %83 : vector<8x4xf32>
      %c4_i32_45 = arith.constant 4 : i32
      %85 = vector.broadcast %c4_i32_45 : i32 to vector<8x4xi32>
      %86 = arith.select %84, %80, %85 : vector<8x4xi1>, vector<8x4xi32>
      %cst_46 = arith.constant dense<2147483647> : vector<8xi32>
      %87 = vector.multi_reduction <minsi>, %86, %cst_46 [1] : vector<8x4xi32> to vector<8xi32>
      %88 = vector.shape_cast %87 : vector<8xi32> to vector<8x1xi32>
      %89 = vector.broadcast %88 : vector<8x1xi32> to vector<8x4xi32>
      %90 = arith.cmpi eq, %80, %89 : vector<8x4xi32>
      %91 = arith.extui %90 : vector<8x4xi1> to vector<8x4xi32>
      %92 = arith.sitofp %91 : vector<8x4xi32> to vector<8x4xf32>
      %c0_47 = arith.constant 0 : index
      %c0_48 = arith.constant 0 : index
      %93 = vector.load %arg11[%c0_47, %c0_48] : memref<8x4xf32, #tpu.memory_space<vmem>>, vector<8x4xf32>
      tpu.vector_store %arg11[%c0_47, %c0_48], %92 {strides = array<i32>} : memref<8x4xf32, #tpu.memory_space<vmem>>, vector<8x4xf32>,
      %cst_49 = arith.constant -1.000000e+30 : f32
      %94 = vector.broadcast %cst_49 : f32 to vector<8x1xf32>
      %c0_50 = arith.constant 0 : index
      %c0_51 = arith.constant 0 : index
      %95 = vector.load %arg8[%c0_50, %c0_51] : memref<8x1xf32, #tpu.memory_space<vmem>>, vector<8x1xf32>
      tpu.vector_store %arg8[%c0_50, %c0_51], %94 {strides = array<i32>} : memref<8x1xf32, #tpu.memory_space<vmem>>, vector<8x1xf32>,
      %cst_52 = arith.constant 1.000000e+30 : f32
      %96 = vector.broadcast %cst_52 : f32 to vector<8x1xf32>
      %c0_53 = arith.constant 0 : index
      %c0_54 = arith.constant 0 : index
      %97 = vector.load %arg9[%c0_53, %c0_54] : memref<8x1xf32, #tpu.memory_space<vmem>>, vector<8x1xf32>
      tpu.vector_store %arg9[%c0_53, %c0_54], %96 {strides = array<i32>} : memref<8x1xf32, #tpu.memory_space<vmem>>, vector<8x1xf32>,
    } else {
    }
    %c0 = arith.constant 0 : index
    %c0_1 = arith.constant 0 : index
    %3 = vector.load %arg3[%c0, %c0_1] : memref<8x32xf32, #tpu.memory_space<vmem>>, vector<8x32xf32>
    %4 = arith.mulf %3, %3 : vector<8x32xf32>
    %cst = arith.constant 1.000000e+00 : f32
    %5 = vector.broadcast %cst : f32 to vector<1x32xf32>
    "tpu.trace_start"() <{level = 10 : i32, message = "od,nd->on"}> : () -> ()
    %cst_2 = arith.constant dense<0.000000e+00> : vector<1x8xf32>
    %6 = tpu.matmul %5, %4, %cst_2 {dimension_numbers = #tpu.dot_dimension_numbers<[1], [1], [0], [0], [0, 0, 1, 0], [], []>} : vector<1x32xf32>, vector<8x32xf32>, vector<1x8xf32> -> vector<1x8xf32>
    "tpu.trace_stop"() : () -> ()
    %c0_3 = arith.constant 0 : index
    %c0_4 = arith.constant 0 : index
    %7 = vector.load %arg2[%c0_3, %c0_4] : memref<8x32xf32, #tpu.memory_space<vmem>>, vector<8x32xf32>
    %8 = arith.truncf %7 : vector<8x32xf32> to vector<8x32xbf16>
    %c0_5 = arith.constant 0 : index
    %c0_6 = arith.constant 0 : index
    %9 = vector.load %arg3[%c0_5, %c0_6] : memref<8x32xf32, #tpu.memory_space<vmem>>, vector<8x32xf32>
    %10 = arith.truncf %9 : vector<8x32xf32> to vector<8x32xbf16>
    "tpu.trace_start"() <{level = 10 : i32, message = "md,nd->mn"}> : () -> ()
    %cst_7 = arith.constant dense<0.000000e+00> : vector<8x8xf32>
    %11 = tpu.matmul %8, %10, %cst_7 {dimension_numbers = #tpu.dot_dimension_numbers<[1], [1], [0], [0], [0, 0, 1, 0], [], []>} : vector<8x32xbf16>, vector<8x32xbf16>, vector<8x8xf32> -> vector<8x8xf32>
    "tpu.trace_stop"() : () -> ()
    %c0_8 = arith.constant 0 : index
    %c0_9 = arith.constant 0 : index
    %12 = vector.load %arg10[%c0_8, %c0_9] : memref<8x1xf32, #tpu.memory_space<vmem>>, vector<8x1xf32>
    %13 = vector.broadcast %12 : vector<8x1xf32> to vector<8x8xf32>
    %14 = vector.broadcast %6 : vector<1x8xf32> to vector<8x8xf32>
    %15 = arith.addf %13, %14 : vector<8x8xf32>
    %cst_10 = arith.constant 2.000000e+00 : f32
    %16 = vector.broadcast %cst_10 : f32 to vector<8x8xf32>
    %17 = arith.mulf %16, %11 : vector<8x8xf32>
    %18 = arith.subf %15, %17 : vector<8x8xf32>
    %cst_11 = arith.constant 0.000000e+00 : f32
    %19 = vector.broadcast %cst_11 : f32 to vector<8x8xf32>
    %20 = arith.maximumf %18, %19 : vector<8x8xf32>
    %c0_12 = arith.constant 0 : index
    %c0_13 = arith.constant 0 : index
    %21 = vector.load %arg5[%c0_12, %c0_13] : memref<8x4xf32, #tpu.memory_space<vmem>>, vector<8x4xf32>
    %22 = tpu.iota {dimensions = array<i32: 1>} : vector<8x4xi32>
    %cst_14 = arith.constant dense<0xFF800000> : vector<8xf32>
    %23 = vector.multi_reduction <maximumf>, %21, %cst_14 [1] : vector<8x4xf32> to vector<8xf32>
    %24 = vector.shape_cast %23 : vector<8xf32> to vector<8x1xf32>
    %25 = vector.broadcast %24 : vector<8x1xf32> to vector<8x4xf32>
    %26 = arith.cmpf oge, %21, %25 : vector<8x4xf32>
    %c4_i32 = arith.constant 4 : i32
    %27 = vector.broadcast %c4_i32 : i32 to vector<8x4xi32>
    %28 = arith.select %26, %22, %27 : vector<8x4xi1>, vector<8x4xi32>
    %cst_15 = arith.constant dense<2147483647> : vector<8xi32>
    %29 = vector.multi_reduction <minsi>, %28, %cst_15 [1] : vector<8x4xi32> to vector<8xi32>
    %30 = vector.shape_cast %29 : vector<8xi32> to vector<8x1xi32>
    %31 = vector.broadcast %30 : vector<8x1xi32> to vector<8x4xi32>
    %32 = arith.cmpi eq, %22, %31 : vector<8x4xi32>
    %33 = arith.extui %32 : vector<8x4xi1> to vector<8x4xi32>
    %34 = arith.sitofp %33 : vector<8x4xi32> to vector<8x4xf32>
    %c0_16 = arith.constant 0 : index
    %c0_17 = arith.constant 0 : index
    %35 = vector.load %arg11[%c0_16, %c0_17] : memref<8x4xf32, #tpu.memory_space<vmem>>, vector<8x4xf32>
    %36 = arith.truncf %35 : vector<8x4xf32> to vector<8x4xbf16>
    %37 = arith.truncf %34 : vector<8x4xf32> to vector<8x4xbf16>
    "tpu.trace_start"() <{level = 10 : i32, message = "me,ne->mn"}> : () -> ()
    %cst_18 = arith.constant dense<0.000000e+00> : vector<8x8xf32>
    %38 = tpu.matmul %36, %37, %cst_18 {dimension_numbers = #tpu.dot_dimension_numbers<[1], [1], [0], [0], [0, 0, 1, 0], [], []>} : vector<8x4xbf16>, vector<8x4xbf16>, vector<8x8xf32> -> vector<8x8xf32>
    %cst_19 = arith.constant 5.000000e-01 : f32
    "tpu.trace_stop"() : () -> ()
    %39 = vector.broadcast %cst_19 : f32 to vector<8x8xf32>
    %40 = arith.cmpf ogt, %38, %39 : vector<8x8xf32>
    %c8_i32 = arith.constant 8 : i32
    %41 = arith.muli %arg0, %c8_i32 : i32
    %42 = tpu.iota {dimensions = array<i32: 0>} : vector<8x8xi32>
    %43 = vector.broadcast %41 : i32 to vector<8x8xi32>
    %44 = arith.addi %43, %42 : vector<8x8xi32>
    %c8_i32_20 = arith.constant 8 : i32
    %45 = arith.muli %arg1, %c8_i32_20 : i32
    %46 = tpu.iota {dimensions = array<i32: 1>} : vector<8x8xi32>
    %47 = vector.broadcast %45 : i32 to vector<8x8xi32>
    %48 = arith.addi %47, %46 : vector<8x8xi32>
    %49 = arith.cmpi ne, %44, %48 : vector<8x8xi32>
    %c8_i32_21 = arith.constant 8 : i32
    %50 = vector.broadcast %c8_i32_21 : i32 to vector<8x8xi32>
    %51 = arith.cmpi slt, %48, %50 : vector<8x8xi32>
    %52 = arith.andi %40, %49 : vector<8x8xi1>
    %53 = arith.andi %52, %51 : vector<8x8xi1>
    %cst_22 = arith.constant dense<true> : vector<8x8xi1>
    %54 = arith.xori %40, %cst_22 : vector<8x8xi1>
    %55 = arith.andi %54, %49 : vector<8x8xi1>
    %56 = arith.andi %55, %51 : vector<8x8xi1>
    %c0_23 = arith.constant 0 : index
    %c0_24 = arith.constant 0 : index
    %57 = vector.load %arg8[%c0_23, %c0_24] : memref<8x1xf32, #tpu.memory_space<vmem>>, vector<8x1xf32>
    %cst_25 = arith.constant -1.000000e+30 : f32
    %58 = vector.broadcast %cst_25 : f32 to vector<8x8xf32>
    %59 = arith.select %53, %20, %58 : vector<8x8xi1>, vector<8x8xf32>
    %cst_26 = arith.constant dense<0xFF800000> : vector<8xf32>
    %60 = vector.multi_reduction <maximumf>, %59, %cst_26 [1] : vector<8x8xf32> to vector<8xf32>
    %61 = vector.shape_cast %60 : vector<8xf32> to vector<8x1xf32>
    %62 = arith.maximumf %57, %61 : vector<8x1xf32>
    %c0_27 = arith.constant 0 : index
    %c0_28 = arith.constant 0 : index
    %63 = vector.load %arg8[%c0_27, %c0_28] : memref<8x1xf32, #tpu.memory_space<vmem>>, vector<8x1xf32>
    tpu.vector_store %arg8[%c0_27, %c0_28], %62 {strides = array<i32>} : memref<8x1xf32, #tpu.memory_space<vmem>>, vector<8x1xf32>,
    %c0_29 = arith.constant 0 : index
    %c0_30 = arith.constant 0 : index
    %64 = vector.load %arg9[%c0_29, %c0_30] : memref<8x1xf32, #tpu.memory_space<vmem>>, vector<8x1xf32>
    %cst_31 = arith.constant 1.000000e+30 : f32
    %65 = vector.broadcast %cst_31 : f32 to vector<8x8xf32>
    %66 = arith.select %56, %20, %65 : vector<8x8xi1>, vector<8x8xf32>
    %cst_32 = arith.constant dense<0x7F800000> : vector<8xf32>
    %67 = vector.multi_reduction <minimumf>, %66, %cst_32 [1] : vector<8x8xf32> to vector<8xf32>
    %68 = vector.shape_cast %67 : vector<8xf32> to vector<8x1xf32>
    %69 = arith.minimumf %64, %68 : vector<8x1xf32>
    %c0_33 = arith.constant 0 : index
    %c0_34 = arith.constant 0 : index
    %70 = vector.load %arg9[%c0_33, %c0_34] : memref<8x1xf32, #tpu.memory_space<vmem>>, vector<8x1xf32>
    tpu.vector_store %arg9[%c0_33, %c0_34], %69 {strides = array<i32>} : memref<8x1xf32, #tpu.memory_space<vmem>>, vector<8x1xf32>,
    %c0_i32_35 = arith.constant 0 : i32
    %71 = arith.cmpi eq, %arg1, %c0_i32_35 : i32
    %72 = arith.extui %71 : i1 to i32
    %c0_i32_36 = arith.constant 0 : i32
    %73 = arith.cmpi ne, %72, %c0_i32_36 : i32
    scf.if %73 {
      %c0_37 = arith.constant 0 : index
      %c0_38 = arith.constant 0 : index
      %74 = vector.load %arg8[%c0_37, %c0_38] : memref<8x1xf32, #tpu.memory_space<vmem>>, vector<8x1xf32>
      %c0_39 = arith.constant 0 : index
      %c0_40 = arith.constant 0 : index
      %75 = vector.load %arg9[%c0_39, %c0_40] : memref<8x1xf32, #tpu.memory_space<vmem>>, vector<8x1xf32>
      %cst_41 = arith.constant -5.000000e+29 : f32
      %76 = vector.broadcast %cst_41 : f32 to vector<8x1xf32>
      %77 = arith.cmpf ogt, %74, %76 : vector<8x1xf32>
      %cst_42 = arith.constant 5.000000e+29 : f32
      %78 = vector.broadcast %cst_42 : f32 to vector<8x1xf32>
      %79 = arith.cmpf olt, %75, %78 : vector<8x1xf32>
      %c8_i32_43 = arith.constant 8 : i32
      %80 = arith.muli %arg0, %c8_i32_43 : i32
      %81 = tpu.iota {dimensions = array<i32: 0>} : vector<8x1xi32>
      %82 = vector.broadcast %80 : i32 to vector<8x1xi32>
      %83 = arith.addi %82, %81 : vector<8x1xi32>
      %c8_i32_44 = arith.constant 8 : i32
      %84 = vector.broadcast %c8_i32_44 : i32 to vector<8x1xi32>
      %85 = arith.cmpi slt, %83, %84 : vector<8x1xi32>
      %86 = arith.andi %77, %79 : vector<8x1xi1>
      %87 = arith.andi %86, %85 : vector<8x1xi1>
      %cst_45 = arith.constant 0.000000e+00 : f32
      %88 = vector.broadcast %cst_45 : f32 to vector<8x1xf32>
      %89 = arith.maximumf %74, %88 : vector<8x1xf32>
      %90 = math.sqrt %89 : vector<8x1xf32>
      %cst_46 = arith.constant 0.000000e+00 : f32
      %91 = vector.broadcast %cst_46 : f32 to vector<8x1xf32>
      %92 = arith.maximumf %75, %91 : vector<8x1xf32>
      %93 = math.sqrt %92 : vector<8x1xf32>
      %94 = arith.subf %90, %93 : vector<8x1xf32>
      %cst_47 = arith.constant 5.000000e-01 : f32
      %95 = vector.broadcast %cst_47 : f32 to vector<8x1xf32>
      %96 = arith.addf %94, %95 : vector<8x1xf32>
      %cst_48 = arith.constant 0.000000e+00 : f32
      %97 = vector.broadcast %cst_48 : f32 to vector<8x1xf32>
      %98 = arith.maximumf %96, %97 : vector<8x1xf32>
      %cst_49 = arith.constant 0.000000e+00 : f32
      %99 = vector.broadcast %cst_49 : f32 to vector<8x1xf32>
      %100 = arith.select %87, %98, %99 : vector<8x1xi1>, vector<8x1xf32>
      %c0_50 = arith.constant 0 : index
      %c0_51 = arith.constant 0 : index
      %101 = vector.load %arg6[%c0_50, %c0_51] : memref<8x1xf32, #tpu.memory_space<vmem>>, vector<8x1xf32>
      tpu.vector_store %arg6[%c0_50, %c0_51], %100 {strides = array<i32>} : memref<8x1xf32, #tpu.memory_space<vmem>>, vector<8x1xf32>,
      %102 = arith.extui %87 : vector<8x1xi1> to vector<8x1xi32>
      %103 = arith.sitofp %102 : vector<8x1xi32> to vector<8x1xf32>
      %c0_52 = arith.constant 0 : index
      %c0_53 = arith.constant 0 : index
      %104 = vector.load %arg7[%c0_52, %c0_53] : memref<8x1xf32, #tpu.memory_space<vmem>>, vector<8x1xf32>
      tpu.vector_store %arg7[%c0_52, %c0_53], %103 {strides = array<i32>} : memref<8x1xf32, #tpu.memory_space<vmem>>, vector<8x1xf32>,
    } else {
    }
    return
  }
  func.func @transform_0(%arg0: i32, %arg1: i32) -> (i32, i32) {
    %c0_i32 = arith.constant 0 : i32
    %c0_i32_0 = arith.constant 0 : i32
    return %arg0, %c0_i32 : i32, i32
  }
  func.func @transform_1(%arg0: i32, %arg1: i32) -> (i32, i32) {
    %c0_i32 = arith.constant 0 : i32
    %c0_i32_0 = arith.constant 0 : i32
    return %arg1, %c0_i32 : i32, i32
  }
  func.func @transform_2(%arg0: i32, %arg1: i32) -> (i32, i32) {
    %c0_i32 = arith.constant 0 : i32
    %c0_i32_0 = arith.constant 0 : i32
    return %arg0, %c0_i32 : i32, i32
  }
  func.func @transform_3(%arg0: i32, %arg1: i32) -> (i32, i32) {
    %c0_i32 = arith.constant 0 : i32
    %c0_i32_0 = arith.constant 0 : i32
    return %arg1, %c0_i32 : i32, i32
  }
  func.func @transform_4(%arg0: i32, %arg1: i32) -> (i32, i32) {
    %c0_i32 = arith.constant 0 : i32
    %c0_i32_0 = arith.constant 0 : i32
    return %arg0, %c0_i32 : i32, i32
  }
  func.func @transform_5(%arg0: i32, %arg1: i32) -> (i32, i32) {
    %c0_i32 = arith.constant 0 : i32
    %c0_i32_0 = arith.constant 0 : i32
    return %arg0, %c0_i32 : i32, i32
  }
}

</mosaic_0001>

<llo_original>
// kernel: tpu_custom_call.1
$region0: #{tpu_custom_call.1}
  #allocation0 [shape = 'u32[]', space=smem, size = 0x4, offset = 0x4, fixed_abs, tag = 'smem constant byte address 0x4 - core index']
  #allocation1 [shape = 'u32[144,128]{1,0:T(1,128)}', space=vmem, size = 0x12000, scoped, tag = 'internal scratch']
  #allocation2 [shape = 'f32[8,1]{1,0:T(8,128)}', space=vmem, size = 0x1000, scoped, tag = 'scratch operand']
  #allocation3 [shape = 'f32[8,1]{1,0:T(8,128)}', space=vmem, size = 0x1000, scoped, tag = 'scratch operand']
  #allocation4 [shape = 'f32[8,1]{1,0:T(8,128)}', space=vmem, size = 0x1000, scoped, tag = 'scratch operand']
  #allocation5 [shape = 'f32[8,4]{1,0:T(8,128)}', space=vmem, size = 0x1000, scoped, tag = 'scratch operand']
  %s0 = inlined_call_operand.hbm [shape: f32[8,32], index: 0, kind: input, shape index: {}]
  %s1 = inlined_call_operand.hbm [shape: f32[8,32], index: 1, kind: input, shape index: {}]
  %s2 = inlined_call_operand.hbm [shape: f32[8,4], index: 2, kind: input, shape index: {}]
  %s3 = inlined_call_operand.hbm [shape: f32[8,4], index: 3, kind: input, shape index: {}]
  %s4 = inlined_call_operand.hbm [shape: f32[8,1], index: 4, kind: output, shape index: {0}]
  %s5 = inlined_call_operand.hbm [shape: f32[8,1], index: 5, kind: output, shape index: {1}]
  %6 = xla_tuple %s4, %s5
  %s7 = sld [smem:[#allocation0]]
  $region58: #{tpu_custom_call.1} parent=0
    _
  %s9 = ssub.s32 1, %s7
  %s10 = scalar_select 0, %s9, %s7
  $region1: #{tpu_custom_call.1} parent=0
    #allocation6 [shape = 'u8[4096]{0}', space=vmem, size = 0x1000, scoped, tag = 'input window, operand 0, single buffered']
    #allocation7 [shape = 's32[1]{0}', space=sflag, size = 0x4, scoped, tag = 'scoped memory for tpu_custom_call.1']
    #allocation8 [shape = 's32[1]{0}', space=sflag, size = 0x4, scoped, tag = 'scoped memory for tpu_custom_call.1']
    #allocation9 [shape = 'u8[4096]{0}', space=vmem, size = 0x1000, scoped, tag = 'input window, operand 1, single buffered']
    #allocation10 [shape = 's32[1]{0}', space=sflag, size = 0x4, scoped, tag = 'scoped memory for tpu_custom_call.1']
    #allocation11 [shape = 'u8[4096]{0}', space=vmem, size = 0x1000, scoped, tag = 'input window, operand 2, single buffered']
    #allocation12 [shape = 'u8[4096]{0}', space=vmem, size = 0x1000, scoped, tag = 'input window, operand 3, single buffered']
    #allocation13 [shape = 's32[1]{0}', space=sflag, size = 0x4, scoped, tag = 'scoped memory for tpu_custom_call.1']
    #allocation14 [shape = 'u8[4096]{0}', space=vmem, size = 0x1000, scoped, tag = 'output window, operand 0, single buffered']
    #allocation15 [shape = 'u8[4096]{0}', space=vmem, size = 0x1000, scoped, tag = 'output window, operand 1, single buffered']
    #allocation16 [shape = 's32[1]{0}', space=sflag, size = 0x4, scoped, tag = 'scoped memory for tpu_custom_call.1']
    %11 = vsyncpa [#allocation7], 0
    %12 = vsyncpa [#allocation10], 0
    %13 = vsyncpa [#allocation13], 0
    %14 = vsyncpa [#allocation8], 0
    %15 = vsyncpa [#allocation16], 0
    // Predicated region
    $region2: #{tpu_custom_call.1} parent=1 // pred_check
      _
    $region3: #{tpu_custom_call.1} parent=1 // pred_check_branch
      %17 = sbr.rel (0) target = $region5
    $region4: #{tpu_custom_call.1} parent=1 // pred_region
      %s19 = ssub.s32 128, 128
      %20 = vsyncadd [#allocation7], %s19
      %s22 = sshll.u32 [#allocation6], 4
      %s23 = int_to_ptr.vmem [resolvable:$true] %s22
      %25 = dma.hbm_to_vmem [thread:$0]  %s0, 128, %s23, [#allocation7]
    $region5: #{tpu_custom_call.1} parent=1 // pred_fallthru
      _
    // Predicated region
    $region6: #{tpu_custom_call.1} parent=1 // pred_check
      _
    $region7: #{tpu_custom_call.1} parent=1 // pred_check_branch
      %27 = sbr.rel (0) target = $region9
    $region8: #{tpu_custom_call.1} parent=1 // pred_region
      %s29 = ssub.s32 128, 128
      %30 = vsyncadd [#allocation10], %s29
      %s32 = sshll.u32 [#allocation9], 4
      %s33 = int_to_ptr.vmem [resolvable:$true] %s32
      %35 = dma.hbm_to_vmem [thread:$0]  %s1, 128, %s33, [#allocation10]
    $region9: #{tpu_custom_call.1} parent=1 // pred_fallthru
      _
    // Predicated region
    $region10: #{tpu_custom_call.1} parent=1 // pred_check
      _
    $region11: #{tpu_custom_call.1} parent=1 // pred_check_branch
      %37 = sbr.rel (0) target = $region13
    $region12: #{tpu_custom_call.1} parent=1 // pred_region
      %s39 = ssub.s32 128, 128
      %40 = vsyncadd [#allocation10], %s39
      %s42 = sshll.u32 [#allocation11], 4
      %s43 = int_to_ptr.vmem [resolvable:$true] %s42
      %45 = dma.hbm_to_vmem [thread:$0]  %s2, 128, %s43, [#allocation10]
    $region13: #{tpu_custom_call.1} parent=1 // pred_fallthru
      _
    // Predicated region
    $region14: #{tpu_custom_call.1} parent=1 // pred_check
      _
    $region15: #{tpu_custom_call.1} parent=1 // pred_check_branch
      %47 = sbr.rel (0) target = $region17
    $region16: #{tpu_custom_call.1} parent=1 // pred_region
      %s49 = ssub.s32 128, 128
      %50 = vsyncadd [#allocation13], %s49
      %s52 = sshll.u32 [#allocation12], 4
      %s53 = int_to_ptr.vmem [resolvable:$true] %s52
      %55 = dma.hbm_to_vmem [thread:$0]  %s3, 128, %s53, [#allocation13]
    $region17: #{tpu_custom_call.1} parent=1 // pred_fallthru
      _
    // Predicated region
    $region18: #{tpu_custom_call.1} parent=1 // pred_check
      _
    $region19: #{tpu_custom_call.1} parent=1 // pred_check_branch
      %57 = sbr.rel (0) target = $region21
    $region20: #{tpu_custom_call.1} parent=1 // pred_region
      %58 = dma.done [#allocation7], 128
    $region21: #{tpu_custom_call.1} parent=1 // pred_fallthru
      _
    // Predicated region
    $region22: #{tpu_custom_call.1} parent=1 // pred_check
      _
    $region23: #{tpu_custom_call.1} parent=1 // pred_check_branch
      %60 = sbr.rel (0) target = $region25
    $region24: #{tpu_custom_call.1} parent=1 // pred_region
      %61 = dma.done [#allocation10], 128
    $region25: #{tpu_custom_call.1} parent=1 // pred_fallthru
      _
    // Predicated region
    $region26: #{tpu_custom_call.1} parent=1 // pred_check
      _
    $region27: #{tpu_custom_call.1} parent=1 // pred_check_branch
      %63 = sbr.rel (0) target = $region29
    $region28: #{tpu_custom_call.1} parent=1 // pred_region
      %64 = dma.done [#allocation10], 128
    $region29: #{tpu_custom_call.1} parent=1 // pred_fallthru
      _
    // Predicated region
    $region30: #{tpu_custom_call.1} parent=1 // pred_check
      _
    $region31: #{tpu_custom_call.1} parent=1 // pred_check_branch
      %66 = sbr.rel (0) target = $region33
    $region32: #{tpu_custom_call.1} parent=1 // pred_region
      %67 = dma.done [#allocation13], 128
    $region33: #{tpu_custom_call.1} parent=1 // pred_fallthru
      _
    %p69 = scmp.eq.s32.totalorder 0, 0
    // Predicated region
    $region34: #{tpu_custom_call.1} parent=1 // pred_check
      %p70 = pneg %p69
    $region35: #{tpu_custom_call.1} parent=1 // pred_check_branch
      %72 = sbr.rel (%p70) target = $region37
    $region36: #{tpu_custom_call.1} parent=1 // pred_region
      %v73 = vld [vmem:[#allocation6] sm:$0xff]
      %v74 = vmul.f32 %v73, %v73
      %vm75 = vcmask 261120
      %v76 = vsel %vm75, %v74, 0.0
      %77 = vadd.xlane.f32.xlu0 %v76
      %v78 = vpop.xlane.xlu0 %77
      %vm79 = vcmask 7168
      %80 = vst.msk [vmem:[#allocation4] sm:$0xff] %vm79, %v78
      %v81 = vld [vmem:[#allocation11] sm:$0xff]
      %v82 = vlaneseq
      %v83 = vand.u32 %v82, 127
      %vm84 = vcmask 31744
      %v85 = vsel %vm84, %v81, -inf
      %86 = vmax.xlane.f32.xlu0 %v85
      %v87 = vpop.xlane.xlu0 %86
      %vm88 = vcmp.ge.f32.partialorder %v81, %v87
      %v89 = vsel %vm88, %v83, 4
      %v90 = vsel %vm84, %v89, 2147483647
      %v91 = vand.u32 %v90, 65535
      %v92 = vshra.s32 %v90, 16
      %v93 = vcvt.s32.f32 %v91
      %v94 = vcvt.s32.f32 %v92
      %95 = vmin.xlane.f32.xlu0 %v94
      %v96 = vpop.xlane.xlu0 %95
      %vm97 = vcmp.eq.f32.partialorder %v94, %v96
      %v98 = vsel %vm97, %v93, inf
      %99 = vmin.xlane.f32.xlu0 %v98
      %v100 = vpop.xlane.xlu0 %99
      %v101 = vcvt.f32.s32 %v100
      %v102 = vcvt.f32.s32 %v96
      %v103 = vshll.u32 %v102, 16
      %v104 = vadd.s32 %v103, %v101
      %vm105 = vcmp.eq.s32.totalorder %v83, %v104
      %v106 = vsel %vm105, 1, 0
      %v107 = vcvt.s32.f32 %v106
      %108 = vst.msk [vmem:[#allocation5] sm:$0xff] %vm84, %v107
      %109 = vst.msk [vmem:[#allocation2] sm:$0xff] %vm79, -1e+30
      %110 = vst.msk [vmem:[#allocation3] sm:$0xff] %vm79, 1e+30
    $region37: #{tpu_custom_call.1} parent=1 // pred_fallthru
      _
    %v111 = vld [vmem:[#allocation9] sm:$0xff]
    %v112 = vmul.f32 %v111, %v111
    %vm113 = vcmask 261120
    %v115 = vsel %vm113, 1.0, 0
    %v118 = vsel %vm113, %v112, 0
    %120 = vmatprep.subr.mxu0 0.0
    %121 = vmatpush1.xpose.msra.mxu0 %v118
    %122 = vmatprep.subr.mxu0 0.0
    %123 = vmatpush1.xpose.msra.mxu0 0.0
    %124 = vmatprep.subr.mxu0 0.0
    %125 = vmatpush1.xpose.msra.mxu0 0.0
    %126 = vmatprep.subr.mxu0 0.0
    %127 = vmatpush1.xpose.msra.mxu0 0.0
    %128 = vmatprep.subr.mxu0 0.0
    %129 = vmatpush1.xpose.msra.mxu0 0.0
    %130 = vmatprep.subr.mxu0 0.0
    %131 = vmatpush1.xpose.msra.mxu0 0.0
    %132 = vmatprep.subr.mxu0 0.0
    %133 = vmatpush1.xpose.msra.mxu0 0.0
    %134 = vmatprep.subr.mxu0 0.0
    %135 = vmatpush1.xpose.msra.mxu0 0.0
    %136 = vmatprep.subr.mxu0 0.0
    %137 = vmatpush1.xpose.msra.mxu0 0.0
    %138 = vmatprep.subr.mxu0 0.0
    %139 = vmatpush1.xpose.msra.mxu0 0.0
    %140 = vmatprep.subr.mxu0 0.0
    %141 = vmatpush1.xpose.msra.mxu0 0.0
    %142 = vmatprep.subr.mxu0 0.0
    %143 = vmatpush1.xpose.msra.mxu0 0.0
    %144 = vmatprep.subr.mxu0 0.0
    %145 = vmatpush1.xpose.msra.mxu0 0.0
    %146 = vmatprep.subr.mxu0 0.0
    %147 = vmatpush1.xpose.msra.mxu0 0.0
    %148 = vmatprep.subr.mxu0 0.0
    %149 = vmatpush1.xpose.msra.mxu0 0.0
    %150 = vmatprep.subr.mxu0 0.0
    %151 = vmatpush1.xpose.msra.mxu0 0.0
    %152 = vmatprep.subr.mxu0 0.0
    %153 = vmatpush1.xpose.msra.mxu0 0.0
    %154 = vmatprep.subr.mxu0 0.0
    %155 = vmatpush1.xpose.msra.mxu0 0.0
    %156 = vmatprep.subr.mxu0 0.0
    %157 = vmatpush1.xpose.msra.mxu0 0.0
    %158 = vmatprep.subr.mxu0 0.0
    %159 = vmatpush1.xpose.msra.mxu0 0.0
    %160 = vmatprep.subr.mxu0 0.0
    %161 = vmatpush1.xpose.msra.mxu0 0.0
    %162 = vmatprep.subr.mxu0 0.0
    %163 = vmatpush1.xpose.msra.mxu0 0.0
    %164 = vmatprep.subr.mxu0 0.0
    %165 = vmatpush1.xpose.msra.mxu0 0.0
    %166 = vmatprep.subr.mxu0 0.0
    %167 = vmatpush1.xpose.msra.mxu0 0.0
    %168 = vmatprep.subr.mxu0 0.0
    %169 = vmatpush1.xpose.msra.mxu0 0.0
    %170 = vmatprep.subr.mxu0 0.0
    %171 = vmatpush1.xpose.msra.mxu0 0.0
    %172 = vmatprep.subr.mxu0 0.0
    %173 = vmatpush1.xpose.msra.mxu0 0.0
    %174 = vmatprep.subr.mxu0 0.0
    %175 = vmatpush1.xpose.msra.mxu0 0.0
    %176 = vmatprep.subr.mxu0 0.0
    %177 = vmatpush1.xpose.msra.mxu0 0.0
    %178 = vmatprep.subr.mxu0 0.0
    %179 = vmatpush1.xpose.msra.mxu0 0.0
    %180 = vmatprep.subr.mxu0 0.0
    %181 = vmatpush1.xpose.msra.mxu0 0.0
    %182 = vmatprep.subr.mxu0 0.0
    %183 = vmatpush1.xpose.msra.mxu0 0.0
    %184 = vmatprep.mubr.f32.mxu0 0.0
    %185 = vmatmul.mubr.f32.gmra.mrb[0].mxu0 %v115
    %v186 = vpop.f32.mrb[0].mxu0
    %v187 = vadd.f32 0.0, %v186
    %v188 = vpop.f32.mrb[0].mxu0
    %189 = vdwg.mxu0
    %v190 = vld [vmem:[#allocation6] sm:$0xff]
    %v191 = vpack.c.bf16 %v190, %v190
    %v192 = vld [vmem:[#allocation9] sm:$0xff]
    %v193 = vpack.c.bf16 %v192, %v192
    %v195 = vsel %vm113, %v191, 0
    %v198 = vsel %vm113, %v193, 0
    %200 = vmatprep.subr.bf16.mxu0 0
    %201 = vmatpush1.bf16.xpose.msra.mxu0 %v198
    %202 = vmatprep.subr.bf16.mxu0 0
    %203 = vmatpush1.bf16.xpose.msra.mxu0 0
    %204 = vmatprep.subr.bf16.mxu0 0
    %205 = vmatpush1.bf16.xpose.msra.mxu0 0
    %206 = vmatprep.subr.bf16.mxu0 0
    %207 = vmatpush1.bf16.xpose.msra.mxu0 0
    %208 = vmatprep.subr.bf16.mxu0 0
    %209 = vmatpush1.bf16.xpose.msra.mxu0 0
    %210 = vmatprep.subr.bf16.mxu0 0
    %211 = vmatpush1.bf16.xpose.msra.mxu0 0
    %212 = vmatprep.subr.bf16.mxu0 0
    %213 = vmatpush1.bf16.xpose.msra.mxu0 0
    %214 = vmatprep.subr.bf16.mxu0 0
    %215 = vmatpush1.bf16.xpose.msra.mxu0 0
    %216 = vmatprep.subr.bf16.mxu0 0
    %217 = vmatpush1.bf16.xpose.msra.mxu0 0
    %218 = vmatprep.subr.bf16.mxu0 0
    %219 = vmatpush1.bf16.xpose.msra.mxu0 0
    %220 = vmatprep.subr.bf16.mxu0 0
    %221 = vmatpush1.bf16.xpose.msra.mxu0 0
    %222 = vmatprep.subr.bf16.mxu0 0
    %223 = vmatpush1.bf16.xpose.msra.mxu0 0
    %224 = vmatprep.subr.bf16.mxu0 0
    %225 = vmatpush1.bf16.xpose.msra.mxu0 0
    %226 = vmatprep.subr.bf16.mxu0 0
    %227 = vmatpush1.bf16.xpose.msra.mxu0 0
    %228 = vmatprep.subr.bf16.mxu0 0
    %229 = vmatpush1.bf16.xpose.msra.mxu0 0
    %230 = vmatprep.subr.bf16.mxu0 0
    %231 = vmatpush1.bf16.xpose.msra.mxu0 0
    %232 = vmatprep.mubr.bf16.mxu0 0
    %233 = vmatmul.mubr.bf16.gmra.mrb[0].mxu0 %v195
    %v234 = vpop.f32.mrb[0].mxu0
    %v235 = vadd.f32 0.0, %v234
    %v236 = vpop.f32.mrb[0].mxu0
    %v237 = vpop.f32.mrb[0].mxu0
    %v238 = vpop.f32.mrb[0].mxu0
    %239 = vdwg.mxu0
    %v240 = vld [vmem:[#allocation4] sm:$0xff]
    %242 = vset.pattern.permute.xlu0 0
    %243 = vperm.xlu0 %242, %v240
    %v244 = vpop.permute.xlu0 %243
    %v246 = vlaneseq
    %v247 = vshrl.u32 %v246, 7
    %v248 = vsub.s32 0, %v247
    %v249 = vrot.slane %v187, %v248
    %v250 = vadd.f32 %v244, %v249
    %v251 = vmul.f32 %v235, 2.0
    %v252 = vsub.f32 %v250, %v251
    %v253 = vmax.f32 %v252, 0.0
    %v254 = vld [vmem:[#allocation12] sm:$0xff]
    %v255 = vlaneseq
    %v256 = vand.u32 %v255, 127
    %vm257 = vcmask 31744
    %v258 = vsel %vm257, %v254, -inf
    %259 = vmax.xlane.f32.xlu0 %v258
    %v260 = vpop.xlane.xlu0 %259
    %vm261 = vcmp.ge.f32.partialorder %v254, %v260
    %v262 = vsel %vm261, %v256, 4
    %v263 = vsel %vm257, %v262, 2147483647
    %v264 = vand.u32 %v263, 65535
    %v265 = vshra.s32 %v263, 16
    %v266 = vcvt.s32.f32 %v264
    %v267 = vcvt.s32.f32 %v265
    %268 = vmin.xlane.f32.xlu0 %v267
    %v269 = vpop.xlane.xlu0 %268
    %vm270 = vcmp.eq.f32.partialorder %v267, %v269
    %v271 = vsel %vm270, %v266, inf
    %272 = vmin.xlane.f32.xlu0 %v271
    %v273 = vpop.xlane.xlu0 %272
    %v274 = vcvt.f32.s32 %v273
    %v275 = vcvt.f32.s32 %v269
    %v276 = vshll.u32 %v275, 16
    %v277 = vadd.s32 %v276, %v274
    %vm278 = vcmp.eq.s32.totalorder %v256, %v277
    %v279 = vld [vmem:[#allocation5] sm:$0xff]
    %v280 = vpack.c.bf16 %v279, %v279
    %v281 = vsel %vm278, 1, 0
    %v282 = vcvt.s32.f32 %v281
    %v283 = vpack.c.bf16 %v282, %v282
    %v285 = vsel %vm257, %v280, 0
    %v288 = vsel %vm257, %v283, 0
    %290 = vmatprep.subr.bf16.mxu0 0
    %291 = vmatpush1.bf16.xpose.msra.mxu0 %v288
    %292 = vmatprep.subr.bf16.mxu0 0
    %293 = vmatpush1.bf16.xpose.msra.mxu0 0
    %294 = vmatprep.subr.bf16.mxu0 0
    %295 = vmatpush1.bf16.xpose.msra.mxu0 0
    %296 = vmatprep.subr.bf16.mxu0 0
    %297 = vmatpush1.bf16.xpose.msra.mxu0 0
    %298 = vmatprep.subr.bf16.mxu0 0
    %299 = vmatpush1.bf16.xpose.msra.mxu0 0
    %300 = vmatprep.subr.bf16.mxu0 0
    %301 = vmatpush1.bf16.xpose.msra.mxu0 0
    %302 = vmatprep.subr.bf16.mxu0 0
    %303 = vmatpush1.bf16.xpose.msra.mxu0 0
    %304 = vmatprep.subr.bf16.mxu0 0
    %305 = vmatpush1.bf16.xpose.msra.mxu0 0
    %306 = vmatprep.subr.bf16.mxu0 0
    %307 = vmatpush1.bf16.xpose.msra.mxu0 0
    %308 = vmatprep.subr.bf16.mxu0 0
    %309 = vmatpush1.bf16.xpose.msra.mxu0 0
    %310 = vmatprep.subr.bf16.mxu0 0
    %311 = vmatpush1.bf16.xpose.msra.mxu0 0
    %312 = vmatprep.subr.bf16.mxu0 0
    %313 = vmatpush1.bf16.xpose.msra.mxu0 0
    %314 = vmatprep.subr.bf16.mxu0 0
    %315 = vmatpush1.bf16.xpose.msra.mxu0 0
    %316 = vmatprep.subr.bf16.mxu0 0
    %317 = vmatpush1.bf16.xpose.msra.mxu0 0
    %318 = vmatprep.subr.bf16.mxu0 0
    %319 = vmatpush1.bf16.xpose.msra.mxu0 0
    %320 = vmatprep.subr.bf16.mxu0 0
    %321 = vmatpush1.bf16.xpose.msra.mxu0 0
    %322 = vmatprep.mubr.bf16.mxu0 0
    %323 = vmatmul.mubr.bf16.gmra.mrb[0].mxu0 %v285
    %v324 = vpop.f32.mrb[0].mxu0
    %v325 = vadd.f32 0.0, %v324
    %v326 = vpop.f32.mrb[0].mxu0
    %v327 = vpop.f32.mrb[0].mxu0
    %v328 = vpop.f32.mrb[0].mxu0
    %329 = vdwg.mxu0
    %vm330 = vcmp.gt.f32.partialorder %v325, 0.5
    %s331 = smul.u32 0, 8
    %v332 = vlaneseq
    %v333 = vshrl.u32 %v332, 7
    %v334 = vstv %s331
    %v335 = vadd.s32 %v334, %v333
    %s336 = smul.u32 0, 8
    %v337 = vstv %s336
    %v338 = vadd.s32 %v337, %v256
    %vm339 = vcmp.ne.s32.totalorder %v335, %v338
    %vm340 = vcmp.lt.s32.totalorder %v338, 8
    %vm341 = vmand %vm330, %vm339
    %vm342 = vmand %vm341, %vm340
    %vm343 = vmxor %vm330, 1
    %vm344 = vmand %vm343, %vm339
    %vm345 = vmand %vm344, %vm340
    %v346 = vld [vmem:[#allocation2] sm:$0xff]
    %v347 = vsel %vm342, %v253, -1e+30
    %vm348 = vcmask 64512
    %v349 = vsel %vm348, %v347, -inf
    %350 = vmax.xlane.f32.xlu0 %v349
    %v351 = vpop.xlane.xlu0 %350
    %v352 = vmax.f32 %v346, %v351
    %vm353 = vcmask 7168
    %354 = vst.msk [vmem:[#allocation2] sm:$0xff] %vm353, %v352
    %v355 = vld [vmem:[#allocation3] sm:$0xff]
    %v356 = vsel %vm345, %v253, 1e+30
    %v357 = vsel %vm348, %v356, inf
    %358 = vmin.xlane.f32.xlu0 %v357
    %v359 = vpop.xlane.xlu0 %358
    %v360 = vmin.f32 %v355, %v359
    %361 = vst.msk [vmem:[#allocation3] sm:$0xff] %vm353, %v360
    // Predicated region
    $region38: #{tpu_custom_call.1} parent=1 // pred_check
      %p362 = pneg %p69
    $region39: #{tpu_custom_call.1} parent=1 // pred_check_branch
      %364 = sbr.rel (%p362) target = $region41
    $region40: #{tpu_custom_call.1} parent=1 // pred_region
      %v365 = vld [vmem:[#allocation2] sm:$0xff]
      %v366 = vld [vmem:[#allocation3] sm:$0xff]
      %vm367 = vcmp.gt.f32.partialorder %v365, -5e+29
      %vm368 = vcmp.lt.f32.partialorder %v366, 5e+29
      %vm369 = vcmp.lt.s32.totalorder %v335, 8
      %vm370 = vmand %vm367, %vm368
      %vm371 = vmand %vm370, %vm369
      %v372 = vmax.f32 %v365, 0.0
      %v373 = vrsqrt.pop %v372
      %v374 = vmul.f32 %v372, %v373
      %vm375 = vcmp.eq.f32.partialorder %v372, inf
      %v376 = vsel %vm375, %v372, %v374
      %vm377 = vcmp.eq.f32.partialorder %v372, 0.0
      %v378 = vand.u32 %v372, 2147483648
      %v379 = vsel %vm377, %v378, %v376
      %v380 = vmax.f32 %v366, 0.0
      %v381 = vrsqrt.pop %v380
      %v382 = vmul.f32 %v380, %v381
      %vm383 = vcmp.eq.f32.partialorder %v380, inf
      %v384 = vsel %vm383, %v380, %v382
      %vm385 = vcmp.eq.f32.partialorder %v380, 0.0
      %v386 = vand.u32 %v380, 2147483648
      %v387 = vsel %vm385, %v386, %v384
      %v388 = vsub.f32 %v379, %v387
      %v389 = vadd.f32 %v388, 0.5
      %v390 = vmax.f32 %v389, 0.0
      %v391 = vsel %vm371, %v390, 0.0
      %392 = vst.msk [vmem:[#allocation14] sm:$0xff] %vm353, %v391
      %v393 = vsel %vm371, 1, 0
      %v394 = vcvt.s32.f32 %v393
      %395 = vst.msk [vmem:[#allocation15] sm:$0xff] %vm353, %v394
    $region41: #{tpu_custom_call.1} parent=1 // pred_fallthru
      _
    // Predicated region
    $region42: #{tpu_custom_call.1} parent=1 // pred_check
      _
    $region43: #{tpu_custom_call.1} parent=1 // pred_check_branch
      %397 = sbr.rel (0) target = $region45
    $region44: #{tpu_custom_call.1} parent=1 // pred_region
      %s399 = ssub.s32 128, 128
      %400 = vsyncadd [#allocation8], %s399
      %s402 = sshll.u32 [#allocation14], 4
      %s403 = int_to_ptr.vmem [resolvable:$true] %s402
      %405 = dma.vmem_to_hbm [thread:$0]  %s403, 128, %s4, [#allocation8]
    $region45: #{tpu_custom_call.1} parent=1 // pred_fallthru
      _
    // Predicated region
    $region46: #{tpu_custom_call.1} parent=1 // pred_check
      _
    $region47: #{tpu_custom_call.1} parent=1 // pred_check_branch
      %407 = sbr.rel (0) target = $region49
    $region48: #{tpu_custom_call.1} parent=1 // pred_region
      %s409 = ssub.s32 128, 128
      %410 = vsyncadd [#allocation16], %s409
      %s412 = sshll.u32 [#allocation15], 4
      %s413 = int_to_ptr.vmem [resolvable:$true] %s412
      %415 = dma.vmem_to_hbm [thread:$0]  %s413, 128, %s5, [#allocation16]
    $region49: #{tpu_custom_call.1} parent=1 // pred_fallthru
      _
    // Predicated region
    $region50: #{tpu_custom_call.1} parent=1 // pred_check
      _
    $region51: #{tpu_custom_call.1} parent=1 // pred_check_branch
      %417 = sbr.rel (0) target = $region53
    $region52: #{tpu_custom_call.1} parent=1 // pred_region
      %418 = dma.done [#allocation8], 128
    $region53: #{tpu_custom_call.1} parent=1 // pred_fallthru
      _
    // Predicated region
    $region54: #{tpu_custom_call.1} parent=1 // pred_check
      _
    $region55: #{tpu_custom_call.1} parent=1 // pred_check_branch
      %420 = sbr.rel (0) target = $region57
    $region56: #{tpu_custom_call.1} parent=1 // pred_region
      %421 = dma.done [#allocation16], 128
    $region57: #{tpu_custom_call.1} parent=1 // pred_fallthru
      _
    %422 = vsyncpa [#allocation7], 1
    %423 = vsyncpa [#allocation10], 1
    %424 = vsyncpa [#allocation13], 1
    %425 = vsyncpa [#allocation8], 1
    %426 = vsyncpa [#allocation16], 1

</llo_original>
